<compile_context>
chip_gen: v7x
topology: tpu7x:2x2x1
jax: 0.10.0
libtpu: 0.0.40
codegen_flags: <defaults>
</compile_context>

<pallas_src>
import functools

import numpy as np
import jax
import jax.numpy as jnp
from jax import lax
from jax.experimental import pallas as pl
from jax.experimental.pallas import tpu as pltpu


_NEG = -1e30  # finite "minus infinity": avoids inf-inf NaNs in the running max


def _round_up(x, m):
    return (x + m - 1) // m * m


# ---------------------------------------------------------------------------
# stateSpace construction (pure NumPy mirror of generateStateSpace)
# ---------------------------------------------------------------------------
def generate_state_space(hierarchy, total_nodes, levels):
    state_space = np.zeros((total_nodes + 1, total_nodes), dtype=np.float32)
    recorded = np.zeros(total_nodes, dtype=np.int32)
    i = 1
    if levels == 2:
        for path in hierarchy:
            if recorded[path[1]] == 0:
                state_space[i, path[1]] = 1
                recorded[path[1]] = 1
                i += 1
            state_space[i, path[1]] = 1
            state_space[i, path[0]] = 1
            i += 1
    elif levels == 3:
        for path in hierarchy:
            if recorded[path[1]] == 0:
                state_space[i, path[1]] = 1
                recorded[path[1]] = 1
                i += 1
            if recorded[path[2]] == 0:
                state_space[i, path[1]] = 1
                state_space[i, path[2]] = 1
                recorded[path[2]] = 1
                i += 1
            state_space[i, path[1]] = 1
            state_space[i, path[2]] = 1
            state_space[i, path[0]] = 1
            i += 1
    assert i == total_nodes + 1, "Invalid StateSpace!!!"
    return state_space


# ---------------------------------------------------------------------------
# Pallas kernel: MXU matmul per (batch tile, state tile) + online reduction
# ---------------------------------------------------------------------------
def tree_loss_kernel(fs_ref, ss_ref, mask_ref, loss_ref,
                     m_ref, z_ref, marg_ref, *,
                     n_states, tile_s, need_state_mask):
    j = pl.program_id(1)                       # state-tile index (reduction axis)

    @pl.when(j == 0)
    def _():
        m_ref[...] = jnp.full(m_ref.shape, _NEG, jnp.float32)
        z_ref[...] = jnp.zeros(z_ref.shape, jnp.float32)
        marg_ref[...] = jnp.zeros(marg_ref.shape, jnp.float32)

    # scores[s, b] = (stateSpace @ fs.T)[s, b]   -- single MXU matmul, f32 acc.
    scores = jnp.dot(ss_ref[...], fs_ref[...],
                     preferred_element_type=jnp.float32)     # (tile_s, tile_b)

    if need_state_mask:
        # Only emitted when S % tile_s != 0: padded state rows (all-zero rows
        # of stateSpace) must not contribute exp(0) to z.
        srow = lax.broadcasted_iota(jnp.int32, scores.shape, 0)
        scores = jnp.where(srow < (n_states - j * tile_s), scores, _NEG)

    # Online (running-max) accumulation across state tiles; the max cancels
    # exactly in log(z) - log(marginal), it is only for overflow safety.
    m_prev = m_ref[...]                                       # (1, tile_b)
    m_new = jnp.maximum(m_prev, jnp.max(scores, axis=0, keepdims=True))
    alpha = jnp.exp(m_prev - m_new)
    p = jnp.exp(scores - m_new)                               # padded rows -> 0
    mask = mask_ref[...].astype(jnp.float32)                  # exactly 0/1
    z_ref[...] = alpha * z_ref[...] + jnp.sum(p, axis=0, keepdims=True)
    marg_ref[...] = alpha * marg_ref[...] + jnp.sum(p * mask, axis=0,
                                                    keepdims=True)
    m_ref[...] = m_new

    @pl.when(j == pl.num_programs(1) - 1)
    def _():
        # loss[b] = -log(marginal / z) = log(z) - log(marginal), lane-dense.
        loss_ref[...] = jnp.log(z_ref[...]) - jnp.log(marg_ref[...])


def tree_loss(fs, state_space, labels, *,
              matmul_dtype=jnp.bfloat16, tile_b=None, tile_s=None,
              vmem_limit_bytes=None):
    """fs: (B, N) f32 logits; state_space: (S, N) 0/1; labels: (B,) int."""
    fs = jnp.asarray(fs, jnp.float32)
    labels = jnp.asarray(labels, jnp.int32)
    ss = jnp.asarray(state_space, jnp.float32)
    B, N = fs.shape
    S = int(ss.shape[0])

    n_pad = _round_up(N, 128)

    # Batch tile (lanes): big to amortize the ~0.35us/step overhead, but kept
    # to >= 2 grid steps when possible so "parallel" can shard across v7x's
    # two TensorCores.
    if tile_b is None:
        tile_b = min(1024, _round_up(B, 128))
        if _round_up(B, tile_b) // tile_b < 2 and B > 128:
            tile_b = _round_up((B + 1) // 2, 128)
    tile_b = max(128, _round_up(min(tile_b, _round_up(B, 128)), 128))

    # State tile (sublanes): multiple of 32 (covers f32/bf16 packing).
    if tile_s is None:
        tile_s = 512
    tile_s = max(32, _round_up(min(tile_s, _round_up(S, 32)), 32))

    itemsize = jnp.dtype(matmul_dtype).itemsize

    def footprint(ts, tb):
        return (2 * n_pad * tb * itemsize        # fs.T tile   (double-buffered)
                + 2 * ts * n_pad * itemsize      # stateSpace tile
                + 2 * ts * tb * itemsize         # label-mask tile
                + 2 * tb * 4                     # loss tile
                + 3 * tb * 4)                    # m / z / marginal scratch

    budget = 44 * 2 ** 20                        # headroom under v7x's 64 MiB
    while footprint(tile_s, tile_b) > budget:
        if tile_s > 64:
            tile_s = _round_up(tile_s // 2, 32)
        elif tile_b > 256:
            tile_b = _round_up(tile_b // 2, 128)
        else:
            break

    s_pad = _round_up(S, tile_s)
    b_pad = _round_up(B, tile_b)
    num_b_tiles = b_pad // tile_b
    num_s_tiles = s_pad // tile_s

    if vmem_limit_bytes is None:
        vmem_limit_bytes = int(min(56 * 2 ** 20,
                                   max(32 * 2 ** 20,
                                       2 * footprint(tile_s, tile_b))))

    # ---- wrapper-side padding / transposes / label-mask gather -------------
    ss_p = jnp.zeros((s_pad, n_pad), jnp.float32).at[:S, :N].set(ss)
    labels_p = jnp.zeros((b_pad,), jnp.int32).at[:B].set(labels)
    # mask[:, b] = stateSpace[:, labels[b]]  (gathered here, NOT in-kernel).
    mask_p = jnp.take(ss_p, labels_p, axis=1).astype(matmul_dtype)   # (s_pad, b_pad)
    ss_mat = ss_p.astype(matmul_dtype)                                # (s_pad, n_pad)
    fsT_p = jnp.zeros((n_pad, b_pad), matmul_dtype)
    fsT_p = fsT_p.at[:N, :B].set(fs.T.astype(matmul_dtype))           # (n_pad, b_pad)

    kernel = functools.partial(tree_loss_kernel, n_states=S, tile_s=tile_s,
                               need_state_mask=(s_pad != S))

    out = pl.pallas_call(
        kernel,
        out_shape=jax.ShapeDtypeStruct((num_b_tiles, 1, tile_b), jnp.float32),
        grid_spec=pltpu.PrefetchScalarGridSpec(
            num_scalar_prefetch=0,
            grid=(num_b_tiles, num_s_tiles),      # reduction (state) axis last
            in_specs=[
                # fs.T tile: resident across the state axis within a batch tile.
                pl.BlockSpec((n_pad, tile_b), lambda i, j: (0, i)),
                # stateSpace row-block: streams along the state axis.
                pl.BlockSpec((tile_s, n_pad), lambda i, j: (j, 0)),
                # per-sample label mask block.
                pl.BlockSpec((tile_s, tile_b), lambda i, j: (j, i)),
            ],
            out_specs=pl.BlockSpec((None, 1, tile_b), lambda i, j: (i, 0, 0)),
            scratch_shapes=[
                pltpu.VMEM((1, tile_b), jnp.float32),   # running max
                pltpu.VMEM((1, tile_b), jnp.float32),   # z
                pltpu.VMEM((1, tile_b), jnp.float32),   # marginal
            ],
        ),
        compiler_params=pltpu.CompilerParams(
            dimension_semantics=("parallel", "arbitrary"),
            vmem_limit_bytes=vmem_limit_bytes,
        ),
    )(fsT_p, ss_mat, mask_p)

    per_sample = out.reshape(-1)[:B]
    # NOTE: padded batch lanes carry finite garbage and are sliced off above;
    # if the mean is ever moved in-kernel they must be masked explicitly.
    return jnp.mean(per_sample), per_sample


# ---------------------------------------------------------------------------
# Pure-JAX reference (mirrors the PyTorch forward semantics, f32)
# ---------------------------------------------------------------------------
def tree_loss_ref(fs, state_space, labels):
    ss = jnp.asarray(state_space, jnp.float32)                   # (S, N)
    fs = jnp.asarray(fs, jnp.float32)
    labels = jnp.asarray(labels, jnp.int32)
    index = ss @ fs.T                                            # (S, B)
    joint = jnp.exp(index)
    z = jnp.sum(joint, axis=0)                                   # (B,)
    mask = (ss[:, labels] > 0).astype(jnp.float32)               # (S, B)
    marginal = jnp.sum(joint * mask, axis=0)                     # (B,)
    losses = -jnp.log(marginal / z)
    return jnp.mean(losses), losses


if __name__ == "__main__":
    def make_hierarchy(num_parents, children_per_parent):
        num_leaves = num_parents * children_per_parent
        total_nodes = num_leaves + num_parents
        hierarchy = [[c, num_leaves + c // children_per_parent]
                     for c in range(num_leaves)]
        return hierarchy, total_nodes, num_leaves

    key = jax.random.PRNGKey(0)
    k1, k2, k3, k4 = jax.random.split(key, 4)

    # --- Case 1: tiny batch, single tile, f32 (tight check vs reference) ---
    hier1, total1, leaves1 = make_hierarchy(3, 3)        # 12 nodes, 13 states
    ss1 = generate_state_space(hier1, total1, levels=2)
    B1 = 4
    fs1 = jax.random.normal(k1, (B1, total1), dtype=jnp.float32)
    lab1 = jax.random.randint(k2, (B1,), 0, leaves1, dtype=jnp.int32)
    mean1, per1 = tree_loss(fs1, ss1, lab1, matmul_dtype=jnp.float32)
    jax.block_until_ready(mean1)
    rmean1, rper1 = tree_loss_ref(fs1, ss1, lab1)
    np.testing.assert_allclose(np.asarray(per1), np.asarray(rper1),
                               rtol=1e-4, atol=1e-4)
    np.testing.assert_allclose(np.asarray(mean1), np.asarray(rmean1),
                               rtol=1e-4, atol=1e-4)

    # --- Case 2: multi-tile grid (2 batch x 3 state tiles), f32, tight tol ---
    hier2, total2, leaves2 = make_hierarchy(8, 8)        # 72 nodes, 73 states
    ss2 = generate_state_space(hier2, total2, levels=2)
    B2 = 200
    fs2 = jax.random.normal(k3, (B2, total2), dtype=jnp.float32)
    lab2 = jax.random.randint(k4, (B2,), 0, leaves2, dtype=jnp.int32)
    mean2, per2 = tree_loss(fs2, ss2, lab2, matmul_dtype=jnp.float32,
                            tile_b=128, tile_s=32)
    jax.block_until_ready(mean2)
    rmean2, rper2 = tree_loss_ref(fs2, ss2, lab2)
    np.testing.assert_allclose(np.asarray(per2), np.asarray(rper2),
                               rtol=1e-4, atol=1e-4)
    np.testing.assert_allclose(np.asarray(mean2), np.asarray(rmean2),
                               rtol=1e-4, atol=1e-4)

    # --- Case 3: same shapes, default bf16 MXU path (loose tol: fs quantized) ---
    mean3, per3 = tree_loss(fs2, ss2, lab2, tile_b=128, tile_s=32)
    jax.block_until_ready(mean3)
    np.testing.assert_allclose(np.asarray(per3), np.asarray(rper2),
                               rtol=1e-1, atol=1e-1)
    np.testing.assert_allclose(np.asarray(mean3), np.asarray(rmean2),
                               rtol=1e-1, atol=1e-1)

    print("KERNEL_OK")
</pallas_src>

<mosaic_0001>
module attributes {stable_mosaic.version = 11 : i64} {
  func.func @tree_loss_kernel(%arg0: i32, %arg1: i32, %arg2: memref<128x128xf32, #tpu.memory_space<vmem>>, %arg3: memref<32x128xf32, #tpu.memory_space<vmem>>, %arg4: memref<32x128xf32, #tpu.memory_space<vmem>>, %arg5: memref<1x1x128xf32, #tpu.memory_space<vmem>>, %arg6: memref<1x128xf32, #tpu.memory_space<vmem>>, %arg7: memref<1x128xf32, #tpu.memory_space<vmem>>, %arg8: memref<1x128xf32, #tpu.memory_space<vmem>>) attributes {dimension_semantics = [#tpu.dimension_semantics<parallel>, #tpu.dimension_semantics<arbitrary>], iteration_bounds = array<i64: 1, 1>, scalar_prefetch = 0 : i64, scratch_operands = 3 : i64, tpu.core_type = #tpu.core_type<tc>, window_params = [{transform_indices = @transform_0, window_bounds = array<i64: 128, 128>}, {transform_indices = @transform_1, window_bounds = array<i64: 32, 128>}, {transform_indices = @transform_2, window_bounds = array<i64: 32, 128>}, {transform_indices = @transform_3, window_bounds = array<i64: 1, 1, 128>}]} {
    %c0_i32 = arith.constant 0 : i32
    %0 = arith.cmpi eq, %arg1, %c0_i32 : i32
    %1 = arith.extui %0 : i1 to i32
    %c0_i32_0 = arith.constant 0 : i32
    %2 = arith.cmpi ne, %1, %c0_i32_0 : i32
    scf.if %2 {
      %cst_24 = arith.constant -1.000000e+30 : f32
      %40 = vector.broadcast %cst_24 : f32 to vector<1x128xf32>
      %c0_25 = arith.constant 0 : index
      %c0_26 = arith.constant 0 : index
      %41 = vector.load %arg6[%c0_25, %c0_26] : memref<1x128xf32, #tpu.memory_space<vmem>>, vector<1x128xf32>
      tpu.vector_store %arg6[%c0_25, %c0_26], %40 {strides = array<i32>} : memref<1x128xf32, #tpu.memory_space<vmem>>, vector<1x128xf32>,
      %cst_27 = arith.constant 0.000000e+00 : f32
      %42 = vector.broadcast %cst_27 : f32 to vector<1x128xf32>
      %c0_28 = arith.constant 0 : index
      %c0_29 = arith.constant 0 : index
      %43 = vector.load %arg7[%c0_28, %c0_29] : memref<1x128xf32, #tpu.memory_space<vmem>>, vector<1x128xf32>
      tpu.vector_store %arg7[%c0_28, %c0_29], %42 {strides = array<i32>} : memref<1x128xf32, #tpu.memory_space<vmem>>, vector<1x128xf32>,
      %cst_30 = arith.constant 0.000000e+00 : f32
      %44 = vector.broadcast %cst_30 : f32 to vector<1x128xf32>
      %c0_31 = arith.constant 0 : index
      %c0_32 = arith.constant 0 : index
      %45 = vector.load %arg8[%c0_31, %c0_32] : memref<1x128xf32, #tpu.memory_space<vmem>>, vector<1x128xf32>
      tpu.vector_store %arg8[%c0_31, %c0_32], %44 {strides = array<i32>} : memref<1x128xf32, #tpu.memory_space<vmem>>, vector<1x128xf32>,
    } else {
    }
    %c0 = arith.constant 0 : index
    %c0_1 = arith.constant 0 : index
    %3 = vector.load %arg3[%c0, %c0_1] : memref<32x128xf32, #tpu.memory_space<vmem>>, vector<32x128xf32>
    %c0_2 = arith.constant 0 : index
    %c0_3 = arith.constant 0 : index
    %4 = vector.load %arg2[%c0_2, %c0_3] : memref<128x128xf32, #tpu.memory_space<vmem>>, vector<128x128xf32>
    %cst = arith.constant dense<0.000000e+00> : vector<32x128xf32>
    %5 = tpu.matmul %3, %4, %cst {dimension_numbers = #tpu.dot_dimension_numbers<[1], [0], [0], [1], [0, 0, 1, 1], [], []>} : vector<32x128xf32>, vector<128x128xf32>, vector<32x128xf32> -> vector<32x128xf32>
    %6 = tpu.iota {dimensions = array<i32: 0>} : vector<32x128xi32>
    %c32_i32 = arith.constant 32 : i32
    %7 = arith.muli %arg1, %c32_i32 : i32
    %c13_i32 = arith.constant 13 : i32
    %8 = arith.subi %c13_i32, %7 : i32
    %9 = vector.broadcast %8 : i32 to vector<32x128xi32>
    %10 = arith.cmpi slt, %6, %9 : vector<32x128xi32>
    %cst_4 = arith.constant -1.000000e+30 : f32
    %11 = vector.broadcast %cst_4 : f32 to vector<32x128xf32>
    %12 = arith.select %10, %5, %11 : vector<32x128xi1>, vector<32x128xf32>
    %c0_5 = arith.constant 0 : index
    %c0_6 = arith.constant 0 : index
    %13 = vector.load %arg6[%c0_5, %c0_6] : memref<1x128xf32, #tpu.memory_space<vmem>>, vector<1x128xf32>
    %cst_7 = arith.constant dense<0xFF800000> : vector<128xf32>
    %14 = vector.multi_reduction <maximumf>, %12, %cst_7 [0] : vector<32x128xf32> to vector<128xf32>
    %15 = vector.shape_cast %14 : vector<128xf32> to vector<1x128xf32>
    %16 = arith.maximumf %13, %15 : vector<1x128xf32>
    %17 = arith.subf %13, %16 : vector<1x128xf32>
    %18 = math.exp %17 : vector<1x128xf32>
    %19 = vector.broadcast %16 : vector<1x128xf32> to vector<32x128xf32>
    %20 = arith.subf %12, %19 : vector<32x128xf32>
    %21 = math.exp %20 : vector<32x128xf32>
    %c0_8 = arith.constant 0 : index
    %c0_9 = arith.constant 0 : index
    %22 = vector.load %arg4[%c0_8, %c0_9] : memref<32x128xf32, #tpu.memory_space<vmem>>, vector<32x128xf32>
    %c0_10 = arith.constant 0 : index
    %c0_11 = arith.constant 0 : index
    %23 = vector.load %arg7[%c0_10, %c0_11] : memref<1x128xf32, #tpu.memory_space<vmem>>, vector<1x128xf32>
    %24 = arith.mulf %18, %23 : vector<1x128xf32>
    %cst_12 = arith.constant dense<0.000000e+00> : vector<128xf32>
    %25 = vector.multi_reduction <add>, %21, %cst_12 [0] : vector<32x128xf32> to vector<128xf32>
    %26 = vector.shape_cast %25 : vector<128xf32> to vector<1x128xf32>
    %27 = arith.addf %24, %26 : vector<1x128xf32>
    %c0_13 = arith.constant 0 : index
    %c0_14 = arith.constant 0 : index
    %28 = vector.load %arg7[%c0_13, %c0_14] : memref<1x128xf32, #tpu.memory_space<vmem>>, vector<1x128xf32>
    tpu.vector_store %arg7[%c0_13, %c0_14], %27 {strides = array<i32>} : memref<1x128xf32, #tpu.memory_space<vmem>>, vector<1x128xf32>,
    %c0_15 = arith.constant 0 : index
    %c0_16 = arith.constant 0 : index
    %29 = vector.load %arg8[%c0_15, %c0_16] : memref<1x128xf32, #tpu.memory_space<vmem>>, vector<1x128xf32>
    %30 = arith.mulf %18, %29 : vector<1x128xf32>
    %31 = arith.mulf %21, %22 : vector<32x128xf32>
    %cst_17 = arith.constant dense<0.000000e+00> : vector<128xf32>
    %32 = vector.multi_reduction <add>, %31, %cst_17 [0] : vector<32x128xf32> to vector<128xf32>
    %33 = vector.shape_cast %32 : vector<128xf32> to vector<1x128xf32>
    %34 = arith.addf %30, %33 : vector<1x128xf32>
    %c0_18 = arith.constant 0 : index
    %c0_19 = arith.constant 0 : index
    %35 = vector.load %arg8[%c0_18, %c0_19] : memref<1x128xf32, #tpu.memory_space<vmem>>, vector<1x128xf32>
    tpu.vector_store %arg8[%c0_18, %c0_19], %34 {strides = array<i32>} : memref<1x128xf32, #tpu.memory_space<vmem>>, vector<1x128xf32>,
    %c0_20 = arith.constant 0 : index
    %c0_21 = arith.constant 0 : index
    %36 = vector.load %arg6[%c0_20, %c0_21] : memref<1x128xf32, #tpu.memory_space<vmem>>, vector<1x128xf32>
    tpu.vector_store %arg6[%c0_20, %c0_21], %16 {strides = array<i32>} : memref<1x128xf32, #tpu.memory_space<vmem>>, vector<1x128xf32>,
    %c0_i32_22 = arith.constant 0 : i32
    %37 = arith.cmpi eq, %arg1, %c0_i32_22 : i32
    %38 = arith.extui %37 : i1 to i32
    %c0_i32_23 = arith.constant 0 : i32
    %39 = arith.cmpi ne, %38, %c0_i32_23 : i32
    scf.if %39 {
      %c0_24 = arith.constant 0 : index
      %c0_25 = arith.constant 0 : index
      %40 = vector.load %arg7[%c0_24, %c0_25] : memref<1x128xf32, #tpu.memory_space<vmem>>, vector<1x128xf32>
      %41 = math.log %40 : vector<1x128xf32>
      %c0_26 = arith.constant 0 : index
      %c0_27 = arith.constant 0 : index
      %42 = vector.load %arg8[%c0_26, %c0_27] : memref<1x128xf32, #tpu.memory_space<vmem>>, vector<1x128xf32>
      %43 = math.log %42 : vector<1x128xf32>
      %44 = arith.subf %41, %43 : vector<1x128xf32>
      %c0_28 = arith.constant 0 : index
      %c0_29 = arith.constant 0 : index
      %c0_30 = arith.constant 0 : index
      %45 = vector.load %arg5[%c0_28, %c0_29, %c0_30] : memref<1x1x128xf32, #tpu.memory_space<vmem>>, vector<1x1x128xf32>
      %46 = vector.shape_cast %45 : vector<1x1x128xf32> to vector<1x128xf32>
      %47 = vector.shape_cast %44 : vector<1x128xf32> to vector<1x1x128xf32>
      tpu.vector_store %arg5[%c0_28, %c0_29, %c0_30], %47 {strides = array<i32>} : memref<1x1x128xf32, #tpu.memory_space<vmem>>, vector<1x1x128xf32>,
    } else {
    }
    return
  }
  func.func @transform_0(%arg0: i32, %arg1: i32) -> (i32, i32) {
    %c0_i32 = arith.constant 0 : i32
    %c0_i32_0 = arith.constant 0 : i32
    return %c0_i32, %arg0 : i32, i32
  }
  func.func @transform_1(%arg0: i32, %arg1: i32) -> (i32, i32) {
    %c0_i32 = arith.constant 0 : i32
    %c0_i32_0 = arith.constant 0 : i32
    return %arg1, %c0_i32 : i32, i32
  }
  func.func @transform_2(%arg0: i32, %arg1: i32) -> (i32, i32) {
    %c0_i32 = arith.constant 0 : i32
    return %arg1, %arg0 : i32, i32
  }
  func.func @transform_3(%arg0: i32, %arg1: i32) -> (i32, i32, i32) {
    %c0_i32 = arith.constant 0 : i32
    %c0_i32_0 = arith.constant 0 : i32
    %c0_i32_1 = arith.constant 0 : i32
    return %arg0, %c0_i32, %c0_i32_0 : i32, i32, i32
  }
}

</mosaic_0001>

<llo_original>
// kernel: tpu_custom_call.1
$region0: #{tpu_custom_call.1}
  #allocation0 [shape = 'u32[]', space=smem, size = 0x4, offset = 0x4, fixed_abs, tag = 'smem constant byte address 0x4 - core index']
  #allocation1 [shape = 'u32[144,128]{1,0:T(1,128)}', space=vmem, size = 0x12000, scoped, tag = 'internal scratch']
  #allocation2 [shape = 'f32[1,128]{1,0:T(1,128)}', space=vmem, size = 0x200, scoped, tag = 'scratch operand']
  #allocation3 [shape = 'f32[1,128]{1,0:T(1,128)}', space=vmem, size = 0x200, scoped, tag = 'scratch operand']
  #allocation4 [shape = 'f32[1,128]{1,0:T(1,128)}', space=vmem, size = 0x200, scoped, tag = 'scratch operand']
  %s0 = inlined_call_operand.hbm [shape: f32[128,128], index: 0, kind: input, shape index: {}]
  %s1 = inlined_call_operand.hbm [shape: f32[32,128], index: 1, kind: input, shape index: {}]
  %s2 = inlined_call_operand.hbm [shape: f32[32,128], index: 2, kind: input, shape index: {}]
  %s3 = inlined_call_operand.hbm [shape: f32[1,1,128], index: 3, kind: output, shape index: {}]
  %s4 = sld [smem:[#allocation0]]
  $region42: #{tpu_custom_call.1} parent=0
    _
  %s6 = ssub.s32 1, %s4
  %s7 = scalar_select 0, %s6, %s4
  $region1: #{tpu_custom_call.1} parent=0
    #allocation5 [shape = 'u8[65536]{0}', space=vmem, size = 0x10000, scoped, tag = 'input window, operand 0, single buffered']
    #allocation6 [shape = 's32[1]{0}', space=sflag, size = 0x4, scoped, tag = 'scoped memory for tpu_custom_call.1']
    #allocation7 [shape = 's32[1]{0}', space=sflag, size = 0x4, scoped, tag = 'scoped memory for tpu_custom_call.1']
    #allocation8 [shape = 'u8[16384]{0}', space=vmem, size = 0x4000, scoped, tag = 'input window, operand 1, single buffered']
    #allocation9 [shape = 's32[1]{0}', space=sflag, size = 0x4, scoped, tag = 'scoped memory for tpu_custom_call.1']
    #allocation10 [shape = 'u8[16384]{0}', space=vmem, size = 0x4000, scoped, tag = 'input window, operand 2, single buffered']
    #allocation11 [shape = 'u8[512]{0}', space=vmem, size = 0x400, scoped, tag = 'output window, operand 0, single buffered']
    %8 = vsyncpa [#allocation6], 0
    %9 = vsyncpa [#allocation9], 0
    %10 = vsyncpa [#allocation7], 0
    // Predicated region
    $region2: #{tpu_custom_call.1} parent=1 // pred_check
      _
    $region3: #{tpu_custom_call.1} parent=1 // pred_check_branch
      %12 = sbr.rel (0) target = $region5
    $region4: #{tpu_custom_call.1} parent=1 // pred_region
      %s14 = ssub.s32 2048, 2048
      %15 = vsyncadd [#allocation6], %s14
      %s16 = sshll.u32 [#allocation5], 4
      %s17 = int_to_ptr.vmem [resolvable:$true] %s16
      %22 = dma.hbm_to_vmem [thread:$0]  %s0, 2048, %s17, [#allocation6], 128, 128, 8
    $region5: #{tpu_custom_call.1} parent=1 // pred_fallthru
      _
    // Predicated region
    $region6: #{tpu_custom_call.1} parent=1 // pred_check
      _
    $region7: #{tpu_custom_call.1} parent=1 // pred_check_branch
      %24 = sbr.rel (0) target = $region9
    $region8: #{tpu_custom_call.1} parent=1 // pred_region
      %s26 = ssub.s32 512, 512
      %27 = vsyncadd [#allocation9], %s26
      %s28 = sshll.u32 [#allocation8], 4
      %s29 = int_to_ptr.vmem [resolvable:$true] %s28
      %34 = dma.hbm_to_vmem [thread:$0]  %s1, 512, %s29, [#allocation9], 128, 128, 8
    $region9: #{tpu_custom_call.1} parent=1 // pred_fallthru
      _
    // Predicated region
    $region10: #{tpu_custom_call.1} parent=1 // pred_check
      _
    $region11: #{tpu_custom_call.1} parent=1 // pred_check_branch
      %36 = sbr.rel (0) target = $region13
    $region12: #{tpu_custom_call.1} parent=1 // pred_region
      %s38 = ssub.s32 512, 512
      %39 = vsyncadd [#allocation9], %s38
      %s40 = sshll.u32 [#allocation10], 4
      %s41 = int_to_ptr.vmem [resolvable:$true] %s40
      %46 = dma.hbm_to_vmem [thread:$0]  %s2, 512, %s41, [#allocation9], 128, 128, 8
    $region13: #{tpu_custom_call.1} parent=1 // pred_fallthru
      _
    // Predicated region
    $region14: #{tpu_custom_call.1} parent=1 // pred_check
      _
    $region15: #{tpu_custom_call.1} parent=1 // pred_check_branch
      %48 = sbr.rel (0) target = $region17
    $region16: #{tpu_custom_call.1} parent=1 // pred_region
      %49 = dma.done [#allocation6], 2048
    $region17: #{tpu_custom_call.1} parent=1 // pred_fallthru
      _
    // Predicated region
    $region18: #{tpu_custom_call.1} parent=1 // pred_check
      _
    $region19: #{tpu_custom_call.1} parent=1 // pred_check_branch
      %51 = sbr.rel (0) target = $region21
    $region20: #{tpu_custom_call.1} parent=1 // pred_region
      %52 = dma.done [#allocation9], 512
    $region21: #{tpu_custom_call.1} parent=1 // pred_fallthru
      _
    // Predicated region
    $region22: #{tpu_custom_call.1} parent=1 // pred_check
      _
    $region23: #{tpu_custom_call.1} parent=1 // pred_check_branch
      %54 = sbr.rel (0) target = $region25
    $region24: #{tpu_custom_call.1} parent=1 // pred_region
      %55 = dma.done [#allocation9], 512
    $region25: #{tpu_custom_call.1} parent=1 // pred_fallthru
      _
    %p56 = scmp.eq.s32.totalorder 0, 0
    // Predicated region
    $region26: #{tpu_custom_call.1} parent=1 // pred_check
      %p57 = pneg %p56
    $region27: #{tpu_custom_call.1} parent=1 // pred_check_branch
      %59 = sbr.rel (%p57) target = $region29
    $region28: #{tpu_custom_call.1} parent=1 // pred_region
      %60 = vst [vmem:[#allocation2] sm:$0x1] -1e+30
      %61 = vst [vmem:[#allocation3] sm:$0x1] 0.0
      %62 = vst [vmem:[#allocation4] sm:$0x1] 0.0
    $region29: #{tpu_custom_call.1} parent=1 // pred_fallthru
      _
    %v63 = vld [vmem:[#allocation8] sm:$0xff]
    %v64 = vld [vmem:[#allocation8 + $0x8] sm:$0xff]
    %v65 = vld [vmem:[#allocation8 + $0x10] sm:$0xff]
    %v66 = vld [vmem:[#allocation8 + $0x18] sm:$0xff]
    %v67 = vld [vmem:[#allocation5] sm:$0xff]
    %v68 = vld [vmem:[#allocation5 + $0x8] sm:$0xff]
    %v69 = vld [vmem:[#allocation5 + $0x10] sm:$0xff]
    %v70 = vld [vmem:[#allocation5 + $0x18] sm:$0xff]
    %v71 = vld [vmem:[#allocation5 + $0x20] sm:$0xff]
    %v72 = vld [vmem:[#allocation5 + $0x28] sm:$0xff]
    %v73 = vld [vmem:[#allocation5 + $0x30] sm:$0xff]
    %v74 = vld [vmem:[#allocation5 + $0x38] sm:$0xff]
    %v75 = vld [vmem:[#allocation5 + $0x40] sm:$0xff]
    %v76 = vld [vmem:[#allocation5 + $0x48] sm:$0xff]
    %v77 = vld [vmem:[#allocation5 + $0x50] sm:$0xff]
    %v78 = vld [vmem:[#allocation5 + $0x58] sm:$0xff]
    %v79 = vld [vmem:[#allocation5 + $0x60] sm:$0xff]
    %v80 = vld [vmem:[#allocation5 + $0x68] sm:$0xff]
    %v81 = vld [vmem:[#allocation5 + $0x70] sm:$0xff]
    %v82 = vld [vmem:[#allocation5 + $0x78] sm:$0xff]
    %83 = vmatprep.subr.mxu0 0.0
    %84 = vmatpush1.msra.mxu0 %v67
    %85 = vmatprep.subr.mxu0 0.0
    %86 = vmatpush1.msra.mxu0 %v68
    %87 = vmatprep.subr.mxu0 0.0
    %88 = vmatpush1.msra.mxu0 %v69
    %89 = vmatprep.subr.mxu0 0.0
    %90 = vmatpush1.msra.mxu0 %v70
    %91 = vmatprep.subr.mxu0 0.0
    %92 = vmatpush1.msra.mxu0 %v71
    %93 = vmatprep.subr.mxu0 0.0
    %94 = vmatpush1.msra.mxu0 %v72
    %95 = vmatprep.subr.mxu0 0.0
    %96 = vmatpush1.msra.mxu0 %v73
    %97 = vmatprep.subr.mxu0 0.0
    %98 = vmatpush1.msra.mxu0 %v74
    %99 = vmatprep.subr.mxu0 0.0
    %100 = vmatpush1.msra.mxu0 %v75
    %101 = vmatprep.subr.mxu0 0.0
    %102 = vmatpush1.msra.mxu0 %v76
    %103 = vmatprep.subr.mxu0 0.0
    %104 = vmatpush1.msra.mxu0 %v77
    %105 = vmatprep.subr.mxu0 0.0
    %106 = vmatpush1.msra.mxu0 %v78
    %107 = vmatprep.subr.mxu0 0.0
    %108 = vmatpush1.msra.mxu0 %v79
    %109 = vmatprep.subr.mxu0 0.0
    %110 = vmatpush1.msra.mxu0 %v80
    %111 = vmatprep.subr.mxu0 0.0
    %112 = vmatpush1.msra.mxu0 %v81
    %113 = vmatprep.subr.mxu0 0.0
    %114 = vmatpush1.msra.mxu0 %v82
    %115 = vmatprep.subr.mxu0 0.0
    %116 = vmatpush1.msra.mxu0 0.0
    %117 = vmatprep.subr.mxu0 0.0
    %118 = vmatpush1.msra.mxu0 0.0
    %119 = vmatprep.subr.mxu0 0.0
    %120 = vmatpush1.msra.mxu0 0.0
    %121 = vmatprep.subr.mxu0 0.0
    %122 = vmatpush1.msra.mxu0 0.0
    %123 = vmatprep.subr.mxu0 0.0
    %124 = vmatpush1.msra.mxu0 0.0
    %125 = vmatprep.subr.mxu0 0.0
    %126 = vmatpush1.msra.mxu0 0.0
    %127 = vmatprep.subr.mxu0 0.0
    %128 = vmatpush1.msra.mxu0 0.0
    %129 = vmatprep.subr.mxu0 0.0
    %130 = vmatpush1.msra.mxu0 0.0
    %131 = vmatprep.subr.mxu0 0.0
    %132 = vmatpush1.msra.mxu0 0.0
    %133 = vmatprep.subr.mxu0 0.0
    %134 = vmatpush1.msra.mxu0 0.0
    %135 = vmatprep.subr.mxu0 0.0
    %136 = vmatpush1.msra.mxu0 0.0
    %137 = vmatprep.subr.mxu0 0.0
    %138 = vmatpush1.msra.mxu0 0.0
    %139 = vmatprep.subr.mxu0 0.0
    %140 = vmatpush1.msra.mxu0 0.0
    %141 = vmatprep.subr.mxu0 0.0
    %142 = vmatpush1.msra.mxu0 0.0
    %143 = vmatprep.subr.mxu0 0.0
    %144 = vmatpush1.msra.mxu0 0.0
    %145 = vmatprep.subr.mxu0 0.0
    %146 = vmatpush1.msra.mxu0 0.0
    %147 = vmatprep.mubr.f32.mxu0 0.0
    %148 = vmatmul.mubr.f32.gmra.mrb[0].mxu0 %v63
    %v149 = vpop.f32.mrb[0].mxu0
    %v150 = vadd.f32 0.0, %v149
    %v151 = vpop.f32.mrb[0].mxu0
    %152 = vmatprep.mubr.f32.mxu0 0.0
    %153 = vmatmul.mubr.f32.gmra.mrb[0].mxu0 %v64
    %v154 = vpop.f32.mrb[0].mxu0
    %v155 = vadd.f32 0.0, %v154
    %v156 = vpop.f32.mrb[0].mxu0
    %157 = vmatprep.mubr.f32.mxu0 0.0
    %158 = vmatmul.mubr.f32.gmra.mrb[0].mxu0 %v65
    %v159 = vpop.f32.mrb[0].mxu0
    %v160 = vadd.f32 0.0, %v159
    %v161 = vpop.f32.mrb[0].mxu0
    %162 = vmatprep.mubr.f32.mxu0 0.0
    %163 = vmatmul.mubr.f32.gmra.mrb[0].mxu0 %v66
    %v164 = vpop.f32.mrb[0].mxu0
    %v165 = vadd.f32 0.0, %v164
    %v166 = vpop.f32.mrb[0].mxu0
    %167 = vdwg.mxu0
    %v168 = vlaneseq
    %v169 = vshrl.u32 %v168, 7
    %v170 = vadd.s32 %v169, 8
    %v171 = vadd.s32 %v169, 16
    %v172 = vadd.s32 %v169, 24
    %s173 = smul.u32 0, 32
    %s174 = ssub.s32 13, %s173
    %v175 = vstv %s174
    %vm176 = vcmp.lt.s32.totalorder %v169, %v175
    %vm177 = vcmp.lt.s32.totalorder %v170, %v175
    %vm178 = vcmp.lt.s32.totalorder %v171, %v175
    %vm179 = vcmp.lt.s32.totalorder %v172, %v175
    %v180 = vsel %vm176, %v150, -1e+30
    %v181 = vsel %vm177, %v155, -1e+30
    %v182 = vsel %vm178, %v160, -1e+30
    %v183 = vsel %vm179, %v165, -1e+30
    %v184 = vld [vmem:[#allocation2] sm:$0x1]
    %v185 = vmax.f32 %v180, %v181
    %v186 = vmax.f32 %v182, %v183
    %v187 = vmax.f32 %v185, %v186
    %v188 = vrot.slane %v187, 4
    %v189 = vmax.f32 %v187, %v188
    %v190 = vrot.slane %v189, 2
    %v191 = vmax.f32 %v189, %v190
    %v192 = vrot.slane %v191, 1
    %v193 = vmax.f32 %v191, %v192
    %v194 = vmax.f32 %v184, %v193
    %v195 = vsub.f32 %v184, %v194
    %v196 = vmul.f32 %v195, 1.442695
    %v197 = vpow.pop %v196
    %v199 = vlaneseq
    %v200 = vshrl.u32 %v199, 7
    %v201 = vsub.s32 0, %v200
    %v202 = vrot.slane %v194, %v201
    %v204 = vsub.f32 %v180, %v202
    %v205 = vsub.f32 %v181, %v202
    %v206 = vsub.f32 %v182, %v202
    %v207 = vsub.f32 %v183, %v202
    %v208 = vmul.f32 %v204, 1.442695
    %v209 = vpow.pop %v208
    %v210 = vmul.f32 %v205, 1.442695
    %v211 = vpow.pop %v210
    %v212 = vmul.f32 %v206, 1.442695
    %v213 = vpow.pop %v212
    %v214 = vmul.f32 %v207, 1.442695
    %v215 = vpow.pop %v214
    %v216 = vld [vmem:[#allocation10] sm:$0xff]
    %v217 = vld [vmem:[#allocation10 + $0x8] sm:$0xff]
    %v218 = vld [vmem:[#allocation10 + $0x10] sm:$0xff]
    %v219 = vld [vmem:[#allocation10 + $0x18] sm:$0xff]
    %v220 = vld [vmem:[#allocation3] sm:$0x1]
    %v221 = vmul.f32 %v197, %v220
    %v222 = vadd.f32 %v209, %v211
    %v223 = vadd.f32 %v222, %v213
    %v224 = vadd.f32 %v223, %v215
    %v225 = vrot.slane %v224, 4
    %v226 = vadd.f32 %v224, %v225
    %v227 = vrot.slane %v226, 2
    %v228 = vadd.f32 %v226, %v227
    %v229 = vrot.slane %v228, 1
    %v230 = vadd.f32 %v228, %v229
    %v231 = vadd.f32 %v221, %v230
    %232 = vst [vmem:[#allocation3] sm:$0x1] %v231
    %v233 = vld [vmem:[#allocation4] sm:$0x1]
    %v234 = vmul.f32 %v197, %v233
    %v235 = vmul.f32 %v209, %v216
    %v236 = vmul.f32 %v211, %v217
    %v237 = vmul.f32 %v213, %v218
    %v238 = vmul.f32 %v215, %v219
    %v239 = vadd.f32 %v235, %v236
    %v240 = vadd.f32 %v239, %v237
    %v241 = vadd.f32 %v240, %v238
    %v242 = vrot.slane %v241, 4
    %v243 = vadd.f32 %v241, %v242
    %v244 = vrot.slane %v243, 2
    %v245 = vadd.f32 %v243, %v244
    %v246 = vrot.slane %v245, 1
    %v247 = vadd.f32 %v245, %v246
    %v248 = vadd.f32 %v234, %v247
    %249 = vst [vmem:[#allocation4] sm:$0x1] %v248
    %250 = vst [vmem:[#allocation2] sm:$0x1] %v194
    // Predicated region
    $region30: #{tpu_custom_call.1} parent=1 // pred_check
      %p251 = pneg %p56
    $region31: #{tpu_custom_call.1} parent=1 // pred_check_branch
      %253 = sbr.rel (%p251) target = $region33
    $region32: #{tpu_custom_call.1} parent=1 // pred_region
      %v254 = vld [vmem:[#allocation3] sm:$0x1]
      %v255 = vlog2.pop %v254
      %v256 = vmul.f32 %v255, 0.6931472
      %v257 = vld [vmem:[#allocation4] sm:$0x1]
      %v258 = vlog2.pop %v257
      %v259 = vmul.f32 %v258, 0.6931472
      %v260 = vsub.f32 %v256, %v259
      %261 = vst [vmem:[#allocation11] sm:$0x1] %v260
    $region33: #{tpu_custom_call.1} parent=1 // pred_fallthru
      _
    // Predicated region
    $region34: #{tpu_custom_call.1} parent=1 // pred_check
      _
    $region35: #{tpu_custom_call.1} parent=1 // pred_check_branch
      %263 = sbr.rel (0) target = $region37
    $region36: #{tpu_custom_call.1} parent=1 // pred_region
      %s265 = ssub.s32 16, 16
      %266 = vsyncadd [#allocation7], %s265
      %s268 = sshll.u32 [#allocation11], 4
      %s269 = int_to_ptr.vmem [resolvable:$true] %s268
      %271 = dma.vmem_to_hbm [thread:$0]  %s269, 16, %s3, [#allocation7]
    $region37: #{tpu_custom_call.1} parent=1 // pred_fallthru
      _
    // Predicated region
    $region38: #{tpu_custom_call.1} parent=1 // pred_check
      _
    $region39: #{tpu_custom_call.1} parent=1 // pred_check_branch
      %273 = sbr.rel (0) target = $region41
    $region40: #{tpu_custom_call.1} parent=1 // pred_region
      %274 = dma.done [#allocation7], 16
    $region41: #{tpu_custom_call.1} parent=1 // pred_fallthru
      _
    %275 = vsyncpa [#allocation6], 1
    %276 = vsyncpa [#allocation9], 1
    %277 = vsyncpa [#allocation7], 1

</llo_original>
